<compile_context>
chip_gen: v7x
topology: tpu7x:2x2x1
jax: 0.10.0
libtpu: 0.0.40
codegen_flags: <defaults>
</compile_context>

<pallas_src>
import math
import functools

import jax
import jax.numpy as jnp
from jax.experimental import pallas as pl
from jax.experimental.pallas import tpu as pltpu

MAX_LENGTH = 16   # max_len used to build the positional-encoding buffer
P_DROP = 0.1      # dropout probability from the module

_BITS_24 = 1 << 24  # dropout threshold resolution


def make_pe_buffer(d_model, max_len=MAX_LENGTH, dtype=jnp.float32):
    """(1, max_len, d_model) sinusoidal buffer, exactly as the PyTorch __init__."""
    position = jnp.arange(max_len, dtype=jnp.float32)[:, None]            # (L, 1)
    div_term = jnp.exp(jnp.arange(0, d_model, 2, dtype=jnp.float32)
                       * (-math.log(10000.0) / d_model))                   # (D/2,)
    pe = jnp.zeros((max_len, d_model), dtype=jnp.float32)
    pe = pe.at[:, 0::2].set(jnp.sin(position * div_term))
    pe = pe.at[:, 1::2].set(jnp.cos(position * div_term))
    return pe[None].astype(dtype)                                          # (1, L, D)


# ----------------------------- kernels ------------------------------------ #

def _pe_add_kernel(x_ref, pe_ref, o_ref):
    """eval mode: x + pe (pe broadcast over the row-tile)."""
    o_ref[...] = (x_ref[...] + pe_ref[...]).astype(o_ref.dtype)


def _pe_dropout_kernel(x_ref, pe_ref, bits_ref, o_ref, *, threshold, scale):
    """training mode: (x + pe) * (keep ? 1/(1-p) : 0), integer-threshold mask."""
    y = x_ref[...] + pe_ref[...]                       # f32 VPU add
    keep = bits_ref[...] >= threshold                  # int32 compare, no convert
    o_ref[...] = (y * jnp.where(keep, scale, 0.0)).astype(o_ref.dtype)


# ----------------------------- wrapper ------------------------------------ #

def _rows_per_tile(n_rows, row_elems, elem_bytes=4, budget_bytes=2 * 1024 * 1024):
    """Rows per grid step: whole array if it fits a ~2 MiB tile (safe for the
    64 MiB VMEM on v7x even with double-buffered x/bits/out), else a
    sublane-aligned multiple of 8."""
    max_rows = max(1, budget_bytes // (row_elems * elem_bytes))
    if n_rows <= max_rows:
        return n_rows                       # block == full dim -> always legal
    return max(8, (max_rows // 8) * 8)      # multiple of 8 (sublane aligned)


def positional_encoding(x, pe, key=None, *, p_drop=P_DROP, training=True):
    """x: (B, S, D); pe: (1, max_len, D); key: jax PRNG key (training only)."""
    B, S, D = x.shape
    assert pe.shape[1] >= S and pe.shape[2] == D

    row = S * D
    x2 = x.reshape(B, row)                       # lane-dense 2D slab
    pe2 = pe[:, :S, :].reshape(1, row)           # slice -> block == full array

    rows_tile = _rows_per_tile(B, row)
    grid = (pl.cdiv(B, rows_tile),)

    row_spec = pl.BlockSpec((rows_tile, row), lambda i: (i, 0))
    pe_spec = pl.BlockSpec((1, row), lambda i: (0, 0))      # resident in VMEM

    apply_dropout = training and p_drop > 0.0
    compiler_params = pltpu.CompilerParams(
        dimension_semantics=("parallel",))       # batch rows are independent

    if apply_dropout:
        assert key is not None, "training-mode dropout needs a PRNG key"
        bits = jax.random.randint(key, (B, row), 0, _BITS_24, dtype=jnp.int32)
        threshold = int(p_drop * _BITS_24)       # drop prob ~= p
        scale = 1.0 / (1.0 - p_drop)
        kernel = functools.partial(_pe_dropout_kernel,
                                   threshold=threshold, scale=scale)
        out2 = pl.pallas_call(
            kernel,
            out_shape=jax.ShapeDtypeStruct((B, row), x.dtype),
            grid=grid,
            in_specs=[row_spec, pe_spec, row_spec],
            out_specs=row_spec,
            compiler_params=compiler_params,
        )(x2, pe2, bits)
    else:
        out2 = pl.pallas_call(
            _pe_add_kernel,
            out_shape=jax.ShapeDtypeStruct((B, row), x.dtype),
            grid=grid,
            in_specs=[row_spec, pe_spec],
            out_specs=row_spec,
            compiler_params=compiler_params,
        )(x2, pe2)

    return out2.reshape(B, S, D)


# ------------------------------ demo --------------------------------------- #

if __name__ == "__main__":
    B, S, D = 2, 8, 32   # batch, seq (<= MAX_LENGTH), d_model

    root = jax.random.PRNGKey(0)
    kx, kdrop = jax.random.split(root)
    x = jax.random.normal(kx, (B, S, D), dtype=jnp.float32)
    pe = make_pe_buffer(D, MAX_LENGTH)

    # training mode (dropout on)
    out = positional_encoding(x, pe, kdrop, training=True)
    jax.block_until_ready(out)

    # eval mode must equal x + pe[:, :S] exactly
    out_eval = positional_encoding(x, pe, None, training=False)
    jax.block_until_ready(out_eval)
    ref = x + pe[:, :S]
    assert jnp.allclose(out_eval, ref, atol=1e-6), "eval-mode mismatch"

    # training mode: every element is either 0 (dropped) or ref / (1 - p)
    scaled = ref * (1.0 / (1.0 - P_DROP))
    ok = jnp.isclose(out, scaled, atol=1e-5) | jnp.isclose(out, 0.0, atol=1e-7)
    assert bool(jnp.all(ok)), "training-mode dropout values out of spec"

    assert out.shape == (B, S, D) and out.dtype == x.dtype
    print("KERNEL_OK")
</pallas_src>

<mosaic_0001>
module attributes {stable_mosaic.version = 11 : i64} {
  func.func @_pe_dropout_kernel(%arg0: i32, %arg1: memref<2x256xf32, #tpu.memory_space<vmem>>, %arg2: memref<1x256xf32, #tpu.memory_space<vmem>>, %arg3: memref<2x256xi32, #tpu.memory_space<vmem>>, %arg4: memref<2x256xf32, #tpu.memory_space<vmem>>) attributes {dimension_semantics = [#tpu.dimension_semantics<parallel>], iteration_bounds = array<i64: 1>, scalar_prefetch = 0 : i64, scratch_operands = 0 : i64, tpu.core_type = #tpu.core_type<tc>, window_params = [{transform_indices = @transform_0, window_bounds = array<i64: 2, 256>}, {pipeline_mode = #tpu.pipeline_mode<synchronous>, transform_indices = @transform_1, window_bounds = array<i64: 1, 256>}, {transform_indices = @transform_2, window_bounds = array<i64: 2, 256>}, {transform_indices = @transform_3, window_bounds = array<i64: 2, 256>}]} {
    %c0 = arith.constant 0 : index
    %c0_0 = arith.constant 0 : index
    %0 = vector.load %arg1[%c0, %c0_0] : memref<2x256xf32, #tpu.memory_space<vmem>>, vector<2x256xf32>
    %c0_1 = arith.constant 0 : index
    %c0_2 = arith.constant 0 : index
    %1 = vector.load %arg2[%c0_1, %c0_2] : memref<1x256xf32, #tpu.memory_space<vmem>>, vector<1x256xf32>
    %2 = vector.broadcast %1 : vector<1x256xf32> to vector<2x256xf32>
    %3 = arith.addf %0, %2 : vector<2x256xf32>
    %c0_3 = arith.constant 0 : index
    %c0_4 = arith.constant 0 : index
    %4 = vector.load %arg3[%c0_3, %c0_4] : memref<2x256xi32, #tpu.memory_space<vmem>>, vector<2x256xi32>
    %c1677721_i32 = arith.constant 1677721 : i32
    %5 = vector.broadcast %c1677721_i32 : i32 to vector<2x256xi32>
    %6 = arith.cmpi sge, %4, %5 : vector<2x256xi32>
    %cst = arith.constant 1.11111116 : f32
    %cst_5 = arith.constant 0.000000e+00 : f32
    %7 = vector.broadcast %cst : f32 to vector<2x256xf32>
    %8 = vector.broadcast %cst_5 : f32 to vector<2x256xf32>
    %9 = arith.select %6, %7, %8 : vector<2x256xi1>, vector<2x256xf32>
    %10 = arith.mulf %3, %9 : vector<2x256xf32>
    %c0_6 = arith.constant 0 : index
    %c0_7 = arith.constant 0 : index
    %11 = vector.load %arg4[%c0_6, %c0_7] : memref<2x256xf32, #tpu.memory_space<vmem>>, vector<2x256xf32>
    tpu.vector_store %arg4[%c0_6, %c0_7], %10 {strides = array<i32>} : memref<2x256xf32, #tpu.memory_space<vmem>>, vector<2x256xf32>,
    return
  }
  func.func @transform_0(%arg0: i32) -> (i32, i32) {
    %c0_i32 = arith.constant 0 : i32
    %c0_i32_0 = arith.constant 0 : i32
    return %arg0, %c0_i32 : i32, i32
  }
  func.func @transform_1(%arg0: i32) -> (i32, i32) {
    %c0_i32 = arith.constant 0 : i32
    %c0_i32_0 = arith.constant 0 : i32
    %c0_i32_1 = arith.constant 0 : i32
    return %c0_i32, %c0_i32_0 : i32, i32
  }
  func.func @transform_2(%arg0: i32) -> (i32, i32) {
    %c0_i32 = arith.constant 0 : i32
    %c0_i32_0 = arith.constant 0 : i32
    return %arg0, %c0_i32 : i32, i32
  }
  func.func @transform_3(%arg0: i32) -> (i32, i32) {
    %c0_i32 = arith.constant 0 : i32
    %c0_i32_0 = arith.constant 0 : i32
    return %arg0, %c0_i32 : i32, i32
  }
}

</mosaic_0001>

<llo_original>
// kernel: tpu_custom_call.1
$region0: #{tpu_custom_call.1}
  #allocation0 [shape = 'u32[]', space=smem, size = 0x4, offset = 0x4, fixed_abs, tag = 'smem constant byte address 0x4 - core index']
  #allocation1 [shape = 'u32[144,128]{1,0:T(1,128)}', space=vmem, size = 0x12000, scoped, tag = 'internal scratch']
  %s0 = inlined_call_operand.hbm [shape: f32[2,256], index: 0, kind: input, shape index: {}]
  %s1 = inlined_call_operand.vmem [shape: f32[1,256], index: 1, kind: input, shape index: {}]
  %s2 = inlined_call_operand.vmem [shape: s32[2,256], index: 2, kind: input, shape index: {}]
  %s3 = inlined_call_operand.hbm [shape: f32[2,256], index: 3, kind: output, shape index: {}]
  %s4 = sld [smem:[#allocation0]]
  $region26: #{tpu_custom_call.1} parent=0
    _
  %s6 = ssub.s32 1, %s4
  %s7 = scalar_select 0, %s6, %s4
  $region1: #{tpu_custom_call.1} parent=0
    #allocation2 [shape = 'u8[2048]{0}', space=vmem, size = 0x800, scoped, tag = 'input window, operand 0, single buffered']
    #allocation3 [shape = 's32[1]{0}', space=sflag, size = 0x4, scoped, tag = 'scoped memory for tpu_custom_call.1']
    #allocation4 [shape = 's32[1]{0}', space=sflag, size = 0x4, scoped, tag = 'scoped memory for tpu_custom_call.1']
    #allocation5 [shape = 'u8[2048]{0}', space=vmem, size = 0x800, scoped, tag = 'output window, operand 0, single buffered']
    %8 = vsyncpa [#allocation3], 0
    %9 = vsyncpa [#allocation4], 0
    // Predicated region
    $region2: #{tpu_custom_call.1} parent=1 // pred_check
      _
    $region3: #{tpu_custom_call.1} parent=1 // pred_check_branch
      %11 = sbr.rel (0) target = $region5
    $region4: #{tpu_custom_call.1} parent=1 // pred_region
      %s13 = ssub.s32 64, 64
      %14 = vsyncadd [#allocation3], %s13
      %s16 = sshll.u32 [#allocation2], 4
      %s17 = int_to_ptr.vmem [resolvable:$true] %s16
      %19 = dma.hbm_to_vmem [thread:$0]  %s0, 64, %s17, [#allocation3]
    $region5: #{tpu_custom_call.1} parent=1 // pred_fallthru
      _
    // Predicated region
    $region6: #{tpu_custom_call.1} parent=1 // pred_check
      _
    $region7: #{tpu_custom_call.1} parent=1 // pred_check_branch
      %21 = sbr.rel (0) target = $region9
    $region8: #{tpu_custom_call.1} parent=1 // pred_region
      _
    $region9: #{tpu_custom_call.1} parent=1 // pred_fallthru
      _
    // Predicated region
    $region10: #{tpu_custom_call.1} parent=1 // pred_check
      _
    $region11: #{tpu_custom_call.1} parent=1 // pred_check_branch
      %23 = sbr.rel (0) target = $region13
    $region12: #{tpu_custom_call.1} parent=1 // pred_region
      _
    $region13: #{tpu_custom_call.1} parent=1 // pred_fallthru
      _
    // Predicated region
    $region14: #{tpu_custom_call.1} parent=1 // pred_check
      _
    $region15: #{tpu_custom_call.1} parent=1 // pred_check_branch
      %25 = sbr.rel (0) target = $region17
    $region16: #{tpu_custom_call.1} parent=1 // pred_region
      %26 = dma.done [#allocation3], 64
    $region17: #{tpu_custom_call.1} parent=1 // pred_fallthru
      _
    %v27 = vld [vmem:[#allocation2] sm:$0xf]
    %v28 = vld [vmem:[%s1] sm:$0x3]
    %v30 = vlaneseq
    %v31 = vshrl.u32 %v30, 7
    %v32 = vsub.s32 0, %v31
    %v33 = vrot.slane %v28, %v32
    %v34 = vlaneseq
    %v35 = vshrl.u32 %v34, 7
    %v36 = vsub.s32 1, %v35
    %v37 = vrot.slane %v28, %v36
    %v38 = vcombine.low %v33, %v37
    %v40 = vunpack.c.l.s4 1983009808
    %v41 = vunpack.c.0.s8 %v40
    %v42 = vlaneseq
    %v43 = vshrl.u32 %v42, 7
    %v44 = vsub.s32 %v41, %v43
    %v45 = vrot.slane %v38, %v44
    %v47 = vadd.f32 %v27, %v45
    %v48 = vld [vmem:[%s2] sm:$0xf]
    %vm49 = vcmp.ge.s32.totalorder %v48, 1677721
    %v50 = vsel %vm49, 1.1111112, 0.0
    %v51 = vmul.f32 %v47, %v50
    %52 = vst [vmem:[#allocation5] sm:$0xf] %v51
    // Predicated region
    $region18: #{tpu_custom_call.1} parent=1 // pred_check
      _
    $region19: #{tpu_custom_call.1} parent=1 // pred_check_branch
      %54 = sbr.rel (0) target = $region21
    $region20: #{tpu_custom_call.1} parent=1 // pred_region
      %s56 = ssub.s32 64, 64
      %57 = vsyncadd [#allocation4], %s56
      %s59 = sshll.u32 [#allocation5], 4
      %s60 = int_to_ptr.vmem [resolvable:$true] %s59
      %62 = dma.vmem_to_hbm [thread:$0]  %s60, 64, %s3, [#allocation4]
    $region21: #{tpu_custom_call.1} parent=1 // pred_fallthru
      _
    // Predicated region
    $region22: #{tpu_custom_call.1} parent=1 // pred_check
      _
    $region23: #{tpu_custom_call.1} parent=1 // pred_check_branch
      %64 = sbr.rel (0) target = $region25
    $region24: #{tpu_custom_call.1} parent=1 // pred_region
      %65 = dma.done [#allocation4], 64
    $region25: #{tpu_custom_call.1} parent=1 // pred_fallthru
      _
    %66 = vsyncpa [#allocation3], 1
    %67 = vsyncpa [#allocation4], 1

</llo_original>
